<compile_context>
chip_gen: v7x
topology: tpu7x:2x2x1
jax: 0.10.0
libtpu: 0.0.40
codegen_flags: <defaults>
</compile_context>

<pallas_src>
import functools

import jax
import jax.numpy as jnp
from jax.experimental import pallas as pl
from jax.experimental.pallas import tpu as pltpu


# ----------------------------------------------------------------------------
# Pallas kernel: gridded accumulator over the collocation (phy) axis.
#   lbl_ref : (2, N_lbl)   rows = [target_lbl, out_lbl]        (VMEM, resident)
#   phy_ref : (64, bn)     channel c on sublanes 8c:8c+8,
#                          channels = [t, c1, c2, x0, v0, out, dx, d2]
#   lam_ref : (4,)  SMEM   [lambda_lbl, lambda_IC_x0, lambda_IC_xdot0, lambda_GvEq]
#   o_ref   : (1, 1)       total loss
#   *_acc   : (8, 1)       sublane-partial running sums (collapsed at finalize)
#   lbl_acc : (1, 1)       sum of squared label errors
# ----------------------------------------------------------------------------
def oscillation_loss_kernel(lbl_ref, phy_ref, lam_ref, o_ref,
                            ex2_acc, ev2_acc, r2_acc, cnt_acc, lbl_acc_ref,
                            *, inv_n_lbl, inv_n_phy):
    step = pl.program_id(0)

    # ---- init + labeled-data partial sum (first grid step only) -----------
    @pl.when(step == 0)
    def _init():
        ex2_acc[...] = jnp.zeros_like(ex2_acc)
        ev2_acc[...] = jnp.zeros_like(ev2_acc)
        r2_acc[...] = jnp.zeros_like(r2_acc)
        cnt_acc[...] = jnp.zeros_like(cnt_acc)
        lbl = lbl_ref[...]                                   # (2, N_lbl)
        d = lbl[0:1, :] - lbl[1:2, :]
        lbl_acc_ref[...] = jnp.sum(d * d, axis=-1, keepdims=True)    # (1, 1)

    # ---- physics block: dense (8, bn) channel tiles ------------------------
    t = phy_ref[0:8, :]
    c1 = phy_ref[8:16, :]
    c2 = phy_ref[16:24, :]
    x0 = phy_ref[24:32, :]
    v0 = phy_ref[32:40, :]
    out = phy_ref[40:48, :]
    dx = phy_ref[48:56, :]
    d2 = phy_ref[56:64, :]

    # Initial-condition mask (padded columns carry t == 1.0 -> mask 0).
    mask = (t == 0.0).astype(jnp.float32)
    ex = x0 - out
    ev = v0 - dx
    resid = d2 + 2.0 * (c1 * c2) * dx + (c2 * c2) * out      # c2*c2, not pow

    # Independent lane reductions into sublane-partial accumulators -- no
    # block-sized temporaries; lambdas / normalizations applied at finalize.
    ex2_acc[...] += jnp.sum(mask * (ex * ex), axis=-1, keepdims=True)
    ev2_acc[...] += jnp.sum(mask * (ev * ev), axis=-1, keepdims=True)
    r2_acc[...] += jnp.sum(resid * resid, axis=-1, keepdims=True)
    cnt_acc[...] += jnp.sum(mask, axis=-1, keepdims=True)

    # ---- finalize (last grid step) -----------------------------------------
    @pl.when(step == pl.num_programs(0) - 1)
    def _finalize():
        ex2 = jnp.sum(ex2_acc[...], axis=0, keepdims=True)   # (1, 1)
        ev2 = jnp.sum(ev2_acc[...], axis=0, keepdims=True)
        r2 = jnp.sum(r2_acc[...], axis=0, keepdims=True)
        cnt = jnp.sum(cnt_acc[...], axis=0, keepdims=True)
        # NOTE: if no t==0 rows exist, cnt==0 -> inf/nan, matching the torch
        # reference's mse_loss on an empty selection.
        loss_lbl = (lam_ref[0] * inv_n_lbl) * lbl_acc_ref[...]
        loss_ic = (lam_ref[1] * ex2 + lam_ref[2] * ev2) / cnt   # exact divide
        loss_gv = (lam_ref[3] * inv_n_phy) * r2
        o_ref[...] = loss_lbl + loss_ic + loss_gv            # (1, 1)


@functools.partial(jax.jit, static_argnames=("block_n",))
def oscillation_loss(inp_lbl, target_lbl, out_lbl, inp_phy, out_phy,
                     dxdt, d2xdt2, lambdas, *, block_n=65536):
    """OscillationLoss forward as one gridded Pallas streaming reduction.

    block_n = collocation points per grid step (8 sublanes x bn lanes of the
    channel-major slab).  Default 65536 -> (64, 8192) f32 = 2 MiB per block,
    4 MiB double-buffered: HBM-bound on all generations, inside every default
    scoped-VMEM budget.  Raise toward 131072 on v6e/v7x if VMEM headroom
    allows; must be a multiple of 1024 when N_phy > block_n.
    """
    del inp_lbl  # unused in the reference forward pass
    # --- label branch: (2, N_lbl) = [target; out] ---------------------------
    lbl_pack = jnp.concatenate(
        [jnp.asarray(target_lbl, jnp.float32).reshape(1, -1),
         jnp.asarray(out_lbl, jnp.float32).reshape(1, -1)], axis=0)
    n_lbl = lbl_pack.shape[1]

    # --- physics branch: channel-major sublane-dense (64, N_pad/8) ----------
    n_phy = int(inp_phy.shape[0])
    if n_phy <= block_n:
        n_pad = -(-n_phy // 8) * 8            # single block == full array dims
    else:
        assert block_n % 1024 == 0, "block_n must be a multiple of 1024"
        n_pad = -(-n_phy // block_n) * block_n
    bn = min(block_n, n_pad) // 8             # lanes per block
    num_blocks = (n_pad // 8) // bn

    phy8 = jnp.concatenate(
        [jnp.asarray(inp_phy, jnp.float32)[:, :5].T,   # t, zeta, omega, x0, v0
         jnp.asarray(out_phy, jnp.float32).reshape(1, -1),
         jnp.asarray(dxdt, jnp.float32).reshape(1, -1),
         jnp.asarray(d2xdt2, jnp.float32).reshape(1, -1)], axis=0)   # (8, N)
    pad = n_pad - n_phy
    if pad:
        # Padded columns: t = 1.0 (never an IC row), all other channels 0.0
        # (exactly zero contribution to every sum).
        pad_cols = jnp.zeros((8, pad), jnp.float32).at[0, :].set(1.0)
        phy8 = jnp.concatenate([phy8, pad_cols], axis=1)
    # Row-major reshape puts channel c on sublane rows 8c:8c+8 (free reshape).
    phy_cm = phy8.reshape(64, n_pad // 8)

    lam = jnp.asarray(lambdas, jnp.float32).reshape(4)

    kernel = functools.partial(oscillation_loss_kernel,
                               inv_n_lbl=1.0 / n_lbl,
                               inv_n_phy=1.0 / n_phy)

    out = pl.pallas_call(
        kernel,
        out_shape=jax.ShapeDtypeStruct((1, 1), jnp.float32),
        grid=(num_blocks,),
        in_specs=[
            pl.BlockSpec((2, n_lbl), lambda i: (0, 0)),          # resident
            # TODO(synk): on v7x add pipeline_mode=pl.Buffered(3) here if the
            # profile still shows exposed DMA at 3.2 TB/s HBM.
            pl.BlockSpec((64, bn), lambda i: (0, i)),            # streamed
            pl.BlockSpec(memory_space=pltpu.MemorySpace.SMEM),   # lambdas
        ],
        out_specs=pl.BlockSpec((1, 1), lambda i: (0, 0)),
        scratch_shapes=[pltpu.VMEM((8, 1), jnp.float32),         # sum mask*ex^2
                        pltpu.VMEM((8, 1), jnp.float32),         # sum mask*ev^2
                        pltpu.VMEM((8, 1), jnp.float32),         # sum resid^2
                        pltpu.VMEM((8, 1), jnp.float32),         # count(t==0)
                        pltpu.VMEM((1, 1), jnp.float32)],        # label SSE
        compiler_params=pltpu.CompilerParams(
            dimension_semantics=("arbitrary",)),                 # reduction axis
        cost_estimate=pl.CostEstimate(
            flops=int(20 * n_phy + 3 * n_lbl),
            transcendentals=0,
            bytes_accessed=int(4 * 64 * (n_pad // 8) + 8 * n_lbl + 4)),
    )(lbl_pack, phy_cm, lam)
    return out[0, 0]


# ----------------------------------------------------------------------------
# Synthetic upstream model (stand-in for the PINN network) + its derivatives.
# torch.autograd.grad(out_phy, inp_phy, ...) is reproduced with jax.grad here.
# ----------------------------------------------------------------------------
def make_mlp_params(key, d_in=6, d_hidden=32, d_out=1):
    k1, k2, k3, k4 = jax.random.split(key, 4)
    return {
        "W1": 0.3 * jax.random.normal(k1, (d_in, d_hidden), jnp.float32),
        "b1": 0.1 * jax.random.normal(k2, (d_hidden,), jnp.float32),
        "W2": 0.3 * jax.random.normal(k3, (d_hidden, d_out), jnp.float32),
        "b2": 0.1 * jax.random.normal(k4, (d_out,), jnp.float32),
    }


def mlp_scalar(params, x_row):
    h = jnp.tanh(x_row @ params["W1"] + params["b1"])
    return (h @ params["W2"] + params["b2"])[0]


def model_and_derivs(params, inp_phy):
    f = lambda x: mlp_scalar(params, x)
    out_phy = jax.vmap(f)(inp_phy)[:, None]                       # (N, 1)
    dfdt = lambda x: jax.grad(f)(x)[0]                            # d out / d t
    dxdt = jax.vmap(dfdt)(inp_phy)                                # (N,)
    d2xdt2 = jax.vmap(lambda x: jax.grad(dfdt)(x)[0])(inp_phy)    # (N,)
    return out_phy, dxdt, d2xdt2


# ----------------------------------------------------------------------------
# Pure-JAX reference (mirrors the PyTorch forward) for a sanity check.
# ----------------------------------------------------------------------------
def reference_loss(target_lbl, out_lbl, inp_phy, out_phy, dxdt, d2xdt2, lam):
    loss_lbl = jnp.mean((target_lbl - out_lbl) ** 2)
    mask = inp_phy[:, 0] == 0.0
    cnt = jnp.sum(mask.astype(jnp.float32))
    loss_ic_x0 = jnp.sum(
        jnp.where(mask[:, None], (inp_phy[:, 3:4] - out_phy) ** 2, 0.0)) / cnt
    loss_ic_xdot0 = jnp.sum(
        jnp.where(mask, (inp_phy[:, 4] - dxdt) ** 2, 0.0)) / cnt
    resid = (d2xdt2 + 2.0 * inp_phy[:, 1] * inp_phy[:, 2] * dxdt
             + inp_phy[:, 2] ** 2.0 * out_phy[:, 0])
    loss_gveq = jnp.mean(resid ** 2)
    return (loss_lbl * lam[0] + loss_ic_x0 * lam[1]
            + loss_ic_xdot0 * lam[2] + loss_gveq * lam[3])


if __name__ == "__main__":
    key = jax.random.PRNGKey(0)
    k_params, k_lbl_in, k_lbl_t, k_lbl_o, k_phy = jax.random.split(key, 5)

    N_LBL = 32

    # Labeled-data branch.
    inp_lbl = jax.random.normal(k_lbl_in, (N_LBL, 6), jnp.float32)
    target_lbl = jax.random.normal(k_lbl_t, (N_LBL, 1), jnp.float32)
    out_lbl = jax.random.normal(k_lbl_o, (N_LBL, 1), jnp.float32)

    params = make_mlp_params(k_params)
    lambdas = jnp.array([1.0, 10.0, 10.0, 0.1], jnp.float32)

    # Case A (n_phy=2000, block_n=1024): exercises the multi-block grid + lane
    # padding path (2000 -> 2048 columns -> 2 steps of (64, 128) blocks).
    # Case B (n_phy=200, default block_n): single full-array block with a
    # non-128-multiple lane count ((64, 25) block).
    for n_phy, blk in ((2000, 1024), (200, 65536)):
        k_case = jax.random.fold_in(k_phy, n_phy)
        # Physics branch: columns = [t, zeta, omega, x0, v0, extra].
        inp_phy = jax.random.uniform(k_case, (n_phy, 6), jnp.float32,
                                     minval=0.1, maxval=1.0)
        # Force the first 8 collocation points to t == 0 (IC rows).
        inp_phy = inp_phy.at[:8, 0].set(0.0)

        # Synthetic network output and its time derivatives (plain-JAX glue;
        # stands in for torch.autograd.grad through the upstream model).
        out_phy, dxdt, d2xdt2 = model_and_derivs(params, inp_phy)

        loss = oscillation_loss(inp_lbl, target_lbl, out_lbl, inp_phy, out_phy,
                                dxdt, d2xdt2, lambdas, block_n=blk)
        loss = jax.block_until_ready(loss)

        ref = reference_loss(target_lbl, out_lbl, inp_phy, out_phy,
                             dxdt, d2xdt2, lambdas)
        assert jnp.isfinite(loss)
        # Exact divide at finalize -> only fp32 summation-order drift remains.
        assert jnp.allclose(loss, ref, rtol=1e-4, atol=1e-6), (n_phy, loss, ref)

    print("KERNEL_OK")
</pallas_src>

<mosaic_0001>
module attributes {stable_mosaic.version = 11 : i64} {
  func.func @oscillation_loss_kernel(%arg0: i32, %arg1: memref<2x32xf32, #tpu.memory_space<vmem>>, %arg2: memref<64x128xf32, #tpu.memory_space<vmem>>, %arg3: memref<4xf32, #tpu.memory_space<smem>>, %arg4: memref<1x1xf32, #tpu.memory_space<vmem>>, %arg5: memref<8x1xf32, #tpu.memory_space<vmem>>, %arg6: memref<8x1xf32, #tpu.memory_space<vmem>>, %arg7: memref<8x1xf32, #tpu.memory_space<vmem>>, %arg8: memref<8x1xf32, #tpu.memory_space<vmem>>, %arg9: memref<1x1xf32, #tpu.memory_space<vmem>>) attributes {dimension_semantics = [#tpu.dimension_semantics<arbitrary>], iteration_bounds = array<i64: 2>, scalar_prefetch = 0 : i64, scratch_operands = 5 : i64, tpu.core_type = #tpu.core_type<tc>, window_params = [{pipeline_mode = #tpu.pipeline_mode<synchronous>, transform_indices = @transform_0, window_bounds = array<i64: 2, 32>}, {transform_indices = @transform_1, window_bounds = array<i64: 64, 128>}, {transform_indices = @transform_2, window_bounds = array<i64: 4>}, {pipeline_mode = #tpu.pipeline_mode<synchronous>, transform_indices = @transform_3, window_bounds = array<i64: 1, 1>}]} {
    %c0_i32 = arith.constant 0 : i32
    %0 = arith.cmpi eq, %arg0, %c0_i32 : i32
    %1 = arith.extui %0 : i1 to i32
    %c0_i32_0 = arith.constant 0 : i32
    %2 = arith.cmpi ne, %1, %c0_i32_0 : i32
    scf.if %2 {
      %cst_31 = arith.constant 0.000000e+00 : f32
      %53 = vector.broadcast %cst_31 : f32 to vector<8x1xf32>
      %c0_32 = arith.constant 0 : index
      %c0_33 = arith.constant 0 : index
      %54 = vector.load %arg5[%c0_32, %c0_33] : memref<8x1xf32, #tpu.memory_space<vmem>>, vector<8x1xf32>
      tpu.vector_store %arg5[%c0_32, %c0_33], %53 {strides = array<i32>} : memref<8x1xf32, #tpu.memory_space<vmem>>, vector<8x1xf32>,
      %cst_34 = arith.constant 0.000000e+00 : f32
      %55 = vector.broadcast %cst_34 : f32 to vector<8x1xf32>
      %c0_35 = arith.constant 0 : index
      %c0_36 = arith.constant 0 : index
      %56 = vector.load %arg6[%c0_35, %c0_36] : memref<8x1xf32, #tpu.memory_space<vmem>>, vector<8x1xf32>
      tpu.vector_store %arg6[%c0_35, %c0_36], %55 {strides = array<i32>} : memref<8x1xf32, #tpu.memory_space<vmem>>, vector<8x1xf32>,
      %cst_37 = arith.constant 0.000000e+00 : f32
      %57 = vector.broadcast %cst_37 : f32 to vector<8x1xf32>
      %c0_38 = arith.constant 0 : index
      %c0_39 = arith.constant 0 : index
      %58 = vector.load %arg7[%c0_38, %c0_39] : memref<8x1xf32, #tpu.memory_space<vmem>>, vector<8x1xf32>
      tpu.vector_store %arg7[%c0_38, %c0_39], %57 {strides = array<i32>} : memref<8x1xf32, #tpu.memory_space<vmem>>, vector<8x1xf32>,
      %cst_40 = arith.constant 0.000000e+00 : f32
      %59 = vector.broadcast %cst_40 : f32 to vector<8x1xf32>
      %c0_41 = arith.constant 0 : index
      %c0_42 = arith.constant 0 : index
      %60 = vector.load %arg8[%c0_41, %c0_42] : memref<8x1xf32, #tpu.memory_space<vmem>>, vector<8x1xf32>
      tpu.vector_store %arg8[%c0_41, %c0_42], %59 {strides = array<i32>} : memref<8x1xf32, #tpu.memory_space<vmem>>, vector<8x1xf32>,
      %c0_43 = arith.constant 0 : index
      %c0_44 = arith.constant 0 : index
      %61 = vector.load %arg1[%c0_43, %c0_44] : memref<2x32xf32, #tpu.memory_space<vmem>>, vector<2x32xf32>
      %62 = vector.extract_strided_slice %61 {offsets = [0, 0], sizes = [1, 32], strides = [1, 1]} : vector<2x32xf32> to vector<1x32xf32>
      %63 = vector.extract_strided_slice %61 {offsets = [1, 0], sizes = [1, 32], strides = [1, 1]} : vector<2x32xf32> to vector<1x32xf32>
      %64 = arith.subf %62, %63 : vector<1x32xf32>
      %65 = arith.mulf %64, %64 : vector<1x32xf32>
      %cst_45 = arith.constant dense<0.000000e+00> : vector<1xf32>
      %66 = vector.multi_reduction <add>, %65, %cst_45 [1] : vector<1x32xf32> to vector<1xf32>
      %67 = vector.shape_cast %66 : vector<1xf32> to vector<1x1xf32>
      %c0_46 = arith.constant 0 : index
      %c0_47 = arith.constant 0 : index
      %68 = vector.load %arg9[%c0_46, %c0_47] : memref<1x1xf32, #tpu.memory_space<vmem>>, vector<1x1xf32>
      tpu.vector_store %arg9[%c0_46, %c0_47], %67 {strides = array<i32>} : memref<1x1xf32, #tpu.memory_space<vmem>>, vector<1x1xf32>,
    } else {
    }
    %c0 = arith.constant 0 : index
    %c0_1 = arith.constant 0 : index
    %3 = vector.load %arg2[%c0, %c0_1] : memref<64x128xf32, #tpu.memory_space<vmem>>, vector<8x128xf32>
    %c8 = arith.constant 8 : index
    %c0_2 = arith.constant 0 : index
    %4 = vector.load %arg2[%c8, %c0_2] : memref<64x128xf32, #tpu.memory_space<vmem>>, vector<8x128xf32>
    %c16 = arith.constant 16 : index
    %c0_3 = arith.constant 0 : index
    %5 = vector.load %arg2[%c16, %c0_3] : memref<64x128xf32, #tpu.memory_space<vmem>>, vector<8x128xf32>
    %c24 = arith.constant 24 : index
    %c0_4 = arith.constant 0 : index
    %6 = vector.load %arg2[%c24, %c0_4] : memref<64x128xf32, #tpu.memory_space<vmem>>, vector<8x128xf32>
    %c32 = arith.constant 32 : index
    %c0_5 = arith.constant 0 : index
    %7 = vector.load %arg2[%c32, %c0_5] : memref<64x128xf32, #tpu.memory_space<vmem>>, vector<8x128xf32>
    %c40 = arith.constant 40 : index
    %c0_6 = arith.constant 0 : index
    %8 = vector.load %arg2[%c40, %c0_6] : memref<64x128xf32, #tpu.memory_space<vmem>>, vector<8x128xf32>
    %c48 = arith.constant 48 : index
    %c0_7 = arith.constant 0 : index
    %9 = vector.load %arg2[%c48, %c0_7] : memref<64x128xf32, #tpu.memory_space<vmem>>, vector<8x128xf32>
    %c56 = arith.constant 56 : index
    %c0_8 = arith.constant 0 : index
    %10 = vector.load %arg2[%c56, %c0_8] : memref<64x128xf32, #tpu.memory_space<vmem>>, vector<8x128xf32>
    %cst = arith.constant 0.000000e+00 : f32
    %11 = vector.broadcast %cst : f32 to vector<8x128xf32>
    %12 = arith.cmpf oeq, %3, %11 : vector<8x128xf32>
    %13 = arith.extui %12 : vector<8x128xi1> to vector<8x128xi32>
    %14 = arith.sitofp %13 : vector<8x128xi32> to vector<8x128xf32>
    %15 = arith.subf %6, %8 : vector<8x128xf32>
    %16 = arith.subf %7, %9 : vector<8x128xf32>
    %17 = arith.mulf %4, %5 : vector<8x128xf32>
    %cst_9 = arith.constant 2.000000e+00 : f32
    %18 = vector.broadcast %cst_9 : f32 to vector<8x128xf32>
    %19 = arith.mulf %18, %17 : vector<8x128xf32>
    %20 = arith.mulf %19, %9 : vector<8x128xf32>
    %21 = arith.addf %10, %20 : vector<8x128xf32>
    %22 = arith.mulf %5, %5 : vector<8x128xf32>
    %23 = arith.mulf %22, %8 : vector<8x128xf32>
    %24 = arith.addf %21, %23 : vector<8x128xf32>
    %c0_10 = arith.constant 0 : index
    %c0_11 = arith.constant 0 : index
    %25 = vector.load %arg5[%c0_10, %c0_11] : memref<8x1xf32, #tpu.memory_space<vmem>>, vector<8x1xf32>
    %26 = arith.mulf %15, %15 : vector<8x128xf32>
    %27 = arith.mulf %14, %26 : vector<8x128xf32>
    %cst_12 = arith.constant dense<0.000000e+00> : vector<8xf32>
    %28 = vector.multi_reduction <add>, %27, %cst_12 [1] : vector<8x128xf32> to vector<8xf32>
    %29 = vector.shape_cast %28 : vector<8xf32> to vector<8x1xf32>
    %30 = arith.addf %25, %29 : vector<8x1xf32>
    %c0_13 = arith.constant 0 : index
    %c0_14 = arith.constant 0 : index
    %31 = vector.load %arg5[%c0_13, %c0_14] : memref<8x1xf32, #tpu.memory_space<vmem>>, vector<8x1xf32>
    tpu.vector_store %arg5[%c0_13, %c0_14], %30 {strides = array<i32>} : memref<8x1xf32, #tpu.memory_space<vmem>>, vector<8x1xf32>,
    %c0_15 = arith.constant 0 : index
    %c0_16 = arith.constant 0 : index
    %32 = vector.load %arg6[%c0_15, %c0_16] : memref<8x1xf32, #tpu.memory_space<vmem>>, vector<8x1xf32>
    %33 = arith.mulf %16, %16 : vector<8x128xf32>
    %34 = arith.mulf %14, %33 : vector<8x128xf32>
    %cst_17 = arith.constant dense<0.000000e+00> : vector<8xf32>
    %35 = vector.multi_reduction <add>, %34, %cst_17 [1] : vector<8x128xf32> to vector<8xf32>
    %36 = vector.shape_cast %35 : vector<8xf32> to vector<8x1xf32>
    %37 = arith.addf %32, %36 : vector<8x1xf32>
    %c0_18 = arith.constant 0 : index
    %c0_19 = arith.constant 0 : index
    %38 = vector.load %arg6[%c0_18, %c0_19] : memref<8x1xf32, #tpu.memory_space<vmem>>, vector<8x1xf32>
    tpu.vector_store %arg6[%c0_18, %c0_19], %37 {strides = array<i32>} : memref<8x1xf32, #tpu.memory_space<vmem>>, vector<8x1xf32>,
    %c0_20 = arith.constant 0 : index
    %c0_21 = arith.constant 0 : index
    %39 = vector.load %arg7[%c0_20, %c0_21] : memref<8x1xf32, #tpu.memory_space<vmem>>, vector<8x1xf32>
    %40 = arith.mulf %24, %24 : vector<8x128xf32>
    %cst_22 = arith.constant dense<0.000000e+00> : vector<8xf32>
    %41 = vector.multi_reduction <add>, %40, %cst_22 [1] : vector<8x128xf32> to vector<8xf32>
    %42 = vector.shape_cast %41 : vector<8xf32> to vector<8x1xf32>
    %43 = arith.addf %39, %42 : vector<8x1xf32>
    %c0_23 = arith.constant 0 : index
    %c0_24 = arith.constant 0 : index
    %44 = vector.load %arg7[%c0_23, %c0_24] : memref<8x1xf32, #tpu.memory_space<vmem>>, vector<8x1xf32>
    tpu.vector_store %arg7[%c0_23, %c0_24], %43 {strides = array<i32>} : memref<8x1xf32, #tpu.memory_space<vmem>>, vector<8x1xf32>,
    %c0_25 = arith.constant 0 : index
    %c0_26 = arith.constant 0 : index
    %45 = vector.load %arg8[%c0_25, %c0_26] : memref<8x1xf32, #tpu.memory_space<vmem>>, vector<8x1xf32>
    %cst_27 = arith.constant dense<0.000000e+00> : vector<8xf32>
    %46 = vector.multi_reduction <add>, %14, %cst_27 [1] : vector<8x128xf32> to vector<8xf32>
    %47 = vector.shape_cast %46 : vector<8xf32> to vector<8x1xf32>
    %48 = arith.addf %45, %47 : vector<8x1xf32>
    %c0_28 = arith.constant 0 : index
    %c0_29 = arith.constant 0 : index
    %49 = vector.load %arg8[%c0_28, %c0_29] : memref<8x1xf32, #tpu.memory_space<vmem>>, vector<8x1xf32>
    tpu.vector_store %arg8[%c0_28, %c0_29], %48 {strides = array<i32>} : memref<8x1xf32, #tpu.memory_space<vmem>>, vector<8x1xf32>,
    %c1_i32 = arith.constant 1 : i32
    %50 = arith.cmpi eq, %arg0, %c1_i32 : i32
    %51 = arith.extui %50 : i1 to i32
    %c0_i32_30 = arith.constant 0 : i32
    %52 = arith.cmpi ne, %51, %c0_i32_30 : i32
    scf.if %52 {
      %c0_31 = arith.constant 0 : index
      %c0_32 = arith.constant 0 : index
      %53 = vector.load %arg5[%c0_31, %c0_32] : memref<8x1xf32, #tpu.memory_space<vmem>>, vector<8x1xf32>
      %cst_33 = arith.constant dense<0.000000e+00> : vector<1xf32>
      %54 = vector.multi_reduction <add>, %53, %cst_33 [0] : vector<8x1xf32> to vector<1xf32>
      %55 = vector.shape_cast %54 : vector<1xf32> to vector<1x1xf32>
      %c0_34 = arith.constant 0 : index
      %c0_35 = arith.constant 0 : index
      %56 = vector.load %arg6[%c0_34, %c0_35] : memref<8x1xf32, #tpu.memory_space<vmem>>, vector<8x1xf32>
      %cst_36 = arith.constant dense<0.000000e+00> : vector<1xf32>
      %57 = vector.multi_reduction <add>, %56, %cst_36 [0] : vector<8x1xf32> to vector<1xf32>
      %58 = vector.shape_cast %57 : vector<1xf32> to vector<1x1xf32>
      %c0_37 = arith.constant 0 : index
      %c0_38 = arith.constant 0 : index
      %59 = vector.load %arg7[%c0_37, %c0_38] : memref<8x1xf32, #tpu.memory_space<vmem>>, vector<8x1xf32>
      %cst_39 = arith.constant dense<0.000000e+00> : vector<1xf32>
      %60 = vector.multi_reduction <add>, %59, %cst_39 [0] : vector<8x1xf32> to vector<1xf32>
      %61 = vector.shape_cast %60 : vector<1xf32> to vector<1x1xf32>
      %c0_40 = arith.constant 0 : index
      %c0_41 = arith.constant 0 : index
      %62 = vector.load %arg8[%c0_40, %c0_41] : memref<8x1xf32, #tpu.memory_space<vmem>>, vector<8x1xf32>
      %cst_42 = arith.constant dense<0.000000e+00> : vector<1xf32>
      %63 = vector.multi_reduction <add>, %62, %cst_42 [0] : vector<8x1xf32> to vector<1xf32>
      %64 = vector.shape_cast %63 : vector<1xf32> to vector<1x1xf32>
      %c0_43 = arith.constant 0 : index
      %65 = memref.load %arg3[%c0_43] : memref<4xf32, #tpu.memory_space<smem>>
      %cst_44 = arith.constant 3.125000e-02 : f32
      %66 = arith.mulf %65, %cst_44 : f32
      %c0_45 = arith.constant 0 : index
      %c0_46 = arith.constant 0 : index
      %67 = vector.load %arg9[%c0_45, %c0_46] : memref<1x1xf32, #tpu.memory_space<vmem>>, vector<1x1xf32>
      %68 = vector.broadcast %66 : f32 to vector<1x1xf32>
      %69 = arith.mulf %68, %67 : vector<1x1xf32>
      %c1 = arith.constant 1 : index
      %70 = memref.load %arg3[%c1] : memref<4xf32, #tpu.memory_space<smem>>
      %71 = vector.broadcast %70 : f32 to vector<1x1xf32>
      %72 = arith.mulf %71, %55 : vector<1x1xf32>
      %c2 = arith.constant 2 : index
      %73 = memref.load %arg3[%c2] : memref<4xf32, #tpu.memory_space<smem>>
      %74 = vector.broadcast %73 : f32 to vector<1x1xf32>
      %75 = arith.mulf %74, %58 : vector<1x1xf32>
      %76 = arith.addf %72, %75 : vector<1x1xf32>
      %77 = arith.divf %76, %64 : vector<1x1xf32>
      %c3 = arith.constant 3 : index
      %78 = memref.load %arg3[%c3] : memref<4xf32, #tpu.memory_space<smem>>
      %cst_47 = arith.constant 5.000000e-04 : f32
      %79 = arith.mulf %78, %cst_47 : f32
      %80 = vector.broadcast %79 : f32 to vector<1x1xf32>
      %81 = arith.mulf %80, %61 : vector<1x1xf32>
      %82 = arith.addf %69, %77 : vector<1x1xf32>
      %83 = arith.addf %82, %81 : vector<1x1xf32>
      %c0_48 = arith.constant 0 : index
      %c0_49 = arith.constant 0 : index
      %84 = vector.load %arg4[%c0_48, %c0_49] : memref<1x1xf32, #tpu.memory_space<vmem>>, vector<1x1xf32>
      tpu.vector_store %arg4[%c0_48, %c0_49], %83 {strides = array<i32>} : memref<1x1xf32, #tpu.memory_space<vmem>>, vector<1x1xf32>,
    } else {
    }
    return
  }
  func.func @transform_0(%arg0: i32) -> (i32, i32) {
    %c0_i32 = arith.constant 0 : i32
    %c0_i32_0 = arith.constant 0 : i32
    %c0_i32_1 = arith.constant 0 : i32
    return %c0_i32, %c0_i32_0 : i32, i32
  }
  func.func @transform_1(%arg0: i32) -> (i32, i32) {
    %c0_i32 = arith.constant 0 : i32
    %c0_i32_0 = arith.constant 0 : i32
    return %c0_i32, %arg0 : i32, i32
  }
  func.func @transform_2(%arg0: i32) -> i32 {
    %c0_i32 = arith.constant 0 : i32
    %c0_i32_0 = arith.constant 0 : i32
    return %c0_i32 : i32
  }
  func.func @transform_3(%arg0: i32) -> (i32, i32) {
    %c0_i32 = arith.constant 0 : i32
    %c0_i32_0 = arith.constant 0 : i32
    %c0_i32_1 = arith.constant 0 : i32
    return %c0_i32, %c0_i32_0 : i32, i32
  }
}

</mosaic_0001>

<llo_original>
// kernel: oscillation_loss.1
$region0: #{oscillation_loss.1}
  #allocation0 [shape = 'u32[]', space=smem, size = 0x4, offset = 0x4, fixed_abs, tag = 'smem constant byte address 0x4 - core index']
  #allocation1 [shape = 'u32[144,128]{1,0:T(1,128)}', space=vmem, size = 0x12000, scoped, tag = 'internal scratch']
  #allocation2 [shape = 'f32[8,1]{1,0:T(8,128)}', space=vmem, size = 0x1000, scoped, tag = 'scratch operand']
  #allocation3 [shape = 'f32[8,1]{1,0:T(8,128)}', space=vmem, size = 0x1000, scoped, tag = 'scratch operand']
  #allocation4 [shape = 'f32[8,1]{1,0:T(8,128)}', space=vmem, size = 0x1000, scoped, tag = 'scratch operand']
  #allocation5 [shape = 'f32[8,1]{1,0:T(8,128)}', space=vmem, size = 0x1000, scoped, tag = 'scratch operand']
  #allocation6 [shape = 'f32[1,1]{1,0:T(1,128)}', space=vmem, size = 0x200, scoped, tag = 'scratch operand']
  %s0 = inlined_call_operand.vmem [shape: f32[2,32], index: 0, kind: input, shape index: {}]
  %s1 = inlined_call_operand.vmem [shape: f32[64,256], index: 1, kind: input, shape index: {}]
  %s2 = inlined_call_operand.vmem [shape: f32[4], index: 2, kind: input, shape index: {}]
  %s3 = inlined_call_operand.hbm [shape: f32[1,1], index: 3, kind: output, shape index: {}]
  %s4 = sld [smem:[#allocation0]]
  $region95: #{oscillation_loss.1} parent=0
    _
  %s6 = ssub.s32 1, %s4
  %s7 = scalar_select 0, %s6, %s4
  $region1: #{oscillation_loss.1} parent=0
    #allocation7 [shape = 'u8[65536]{0}', space=vmem, size = 0x10000, scoped, tag = 'input window, operand 1']
    #allocation8 [shape = 'u8[512]{0}', space=smem, size = 0x200, scoped, tag = 'input window, operand 2, single buffered']
    #allocation9 [shape = 's32[2]{0}', space=sflag, size = 0x8, scoped, tag = 'scoped memory for oscillation_loss.1']
    #allocation10 [shape = 's32[2]{0}', space=sflag, size = 0x8, scoped, tag = 'scoped memory for oscillation_loss.1']
    #allocation11 [shape = 'u8[512]{0}', space=vmem, size = 0x400, scoped, tag = 'output window, operand 0, single buffered']
    %8 = vsyncpa [#allocation10], 0
    %9 = vsyncpa [#allocation9], 0
    loop: start=0, step=1, limit=4
    $region2: #{oscillation_loss.1} parent=1 // loop_pre_header
      _
    $region3: #{oscillation_loss.1} parent=1 // loop_header
      %s11 = sphi 0, %s15
      %p12 = scmp.ge.s32.totalorder %s11, 4
      %s19 = sphi 0, %s19
      %s21 = sphi 0, %s19
      %s22 = sphi 0, %s21
      %s36 = sphi 0, %s22
      %s42 = sphi 0, %s44
      %s45 = sphi 0, %s42
      %s46 = sphi 0, %s45
      %s62 = sphi 0, %s46
      %s66 = sphi 0, %s66
      %s68 = sphi 0, %s66
      %s69 = sphi 0, %s68
      %s83 = sphi 0, %s69
      %s87 = sphi 0, %s87
      %s89 = sphi 0, %s87
      %s90 = sphi 0, %s89
      %s104 = sphi 0, %s90
    $region4: #{oscillation_loss.1} parent=1 // loop_header_branch
      %14 = sbr.rel (%p12) target = $region8
    $region5: #{oscillation_loss.1} parent=1 // loop_body
      %s16 = ssub.s32 %s11, 1
      %s17 = ssub.s32 %s11, 2
      %s18 = sadd.s32 %s11, 1
      %s20 = sadd.s32 %s19, 1
      %p23 = scmp.eq.s32.totalorder %s11, 1
      %p24 = scmp.ne.s32.totalorder %s19, %s21
      %p25 = scmp.eq.s32.totalorder %s11, 0
      %p26 = por %p24, %p25
      %p27 = scmp.ne.s32.totalorder %s19, %s21
      %p28 = scmp.eq.s32.totalorder %s16, 1
      %p29 = por %p27, %p28
      %p30 = scmp.ne.s32.totalorder %s21, %s22
      %p31 = scmp.eq.s32.totalorder %s16, 0
      %p32 = por %p30, %p31
      %p33 = scmp.ne.s32.totalorder %s21, %s22
      %p34 = scmp.eq.s32.totalorder %s17, 1
      %p35 = por %p33, %p34
      %p37 = scmp.ne.s32.totalorder %s22, %s36
      %p38 = scmp.eq.s32.totalorder %s17, 0
      %p39 = por %p37, %p38
      %s40 = ssub.s32 %s11, %s18
      %p41 = scmp.eq.s32.totalorder %s40, 0
      %s43 = sadd.s32 %s42, 1
      %s44 = scalar_select %p41, %s42, %s43
      %p47 = pneg %p41
      %p48 = scmp.eq.s32.totalorder %s11, 1
      %p49 = por %p47, %p48
      %p50 = scmp.ne.s32.totalorder %s42, %s45
      %p51 = scmp.eq.s32.totalorder %s11, 0
      %p52 = por %p50, %p51
      %p53 = scmp.ne.s32.totalorder %s42, %s45
      %p54 = scmp.eq.s32.totalorder %s16, 1
      %p55 = por %p53, %p54
      %p56 = scmp.ne.s32.totalorder %s45, %s46
      %p57 = scmp.eq.s32.totalorder %s16, 0
      %p58 = por %p56, %p57
      %p59 = scmp.ne.s32.totalorder %s45, %s46
      %p60 = scmp.eq.s32.totalorder %s17, 1
      %p61 = por %p59, %p60
      %p63 = scmp.ne.s32.totalorder %s46, %s62
      %p64 = scmp.eq.s32.totalorder %s17, 0
      %p65 = por %p63, %p64
      %s67 = sadd.s32 %s66, 1
      %p70 = scmp.eq.s32.totalorder %s11, 1
      %p71 = scmp.ne.s32.totalorder %s66, %s68
      %p72 = scmp.eq.s32.totalorder %s11, 0
      %p73 = por %p71, %p72
      %p74 = scmp.ne.s32.totalorder %s66, %s68
      %p75 = scmp.eq.s32.totalorder %s16, 1
      %p76 = por %p74, %p75
      %p77 = scmp.ne.s32.totalorder %s68, %s69
      %p78 = scmp.eq.s32.totalorder %s16, 0
      %p79 = por %p77, %p78
      %p80 = scmp.ne.s32.totalorder %s68, %s69
      %p81 = scmp.eq.s32.totalorder %s17, 1
      %p82 = por %p80, %p81
      %p84 = scmp.ne.s32.totalorder %s69, %s83
      %p85 = scmp.eq.s32.totalorder %s17, 0
      %p86 = por %p84, %p85
      %s88 = sadd.s32 %s87, 1
      %p91 = scmp.eq.s32.totalorder %s11, 1
      %p92 = scmp.ne.s32.totalorder %s87, %s89
      %p93 = scmp.eq.s32.totalorder %s11, 0
      %p94 = por %p92, %p93
      %p95 = scmp.ne.s32.totalorder %s87, %s89
      %p96 = scmp.eq.s32.totalorder %s16, 1
      %p97 = por %p95, %p96
      %p98 = scmp.ne.s32.totalorder %s89, %s90
      %p99 = scmp.eq.s32.totalorder %s16, 0
      %p100 = por %p98, %p99
      %p101 = scmp.ne.s32.totalorder %s89, %s90
      %p102 = scmp.eq.s32.totalorder %s17, 1
      %p103 = por %p101, %p102
      %p105 = scmp.ne.s32.totalorder %s90, %s104
      %p106 = scmp.eq.s32.totalorder %s17, 0
      %p107 = por %p105, %p106
      %p108 = scmp.le.s32.totalorder 1, %s11
      %p109 = scmp.lt.s32.totalorder %s11, 3
      %p110 = pnand %p108, %p109
      %p111 = pneg %p110
      // Predicated region
      $region9: #{oscillation_loss.1} parent=5 // pred_check
        _
      $region10: #{oscillation_loss.1} parent=5 // pred_check_branch
        %113 = sbr.rel (%p110) target = $region12
      $region11: #{oscillation_loss.1} parent=5 // pred_region
        %s114 = ssub.s32 %s11, 1
        // Predicated region
        $region13: #{oscillation_loss.1} parent=11 // pred_check
          %p115 = pneg %p32
        $region14: #{oscillation_loss.1} parent=11 // pred_check_branch
          %117 = sbr.rel (%p115) target = $region16
        $region15: #{oscillation_loss.1} parent=11 // pred_region
          _
        $region16: #{oscillation_loss.1} parent=11 // pred_fallthru
          _
        // Predicated region
        $region17: #{oscillation_loss.1} parent=11 // pred_check
          %p118 = pneg %p79
        $region18: #{oscillation_loss.1} parent=11 // pred_check_branch
          %120 = sbr.rel (%p118) target = $region20
        $region19: #{oscillation_loss.1} parent=11 // pred_region
          %s122 = ssub.s32 16, 16
          %123 = vsyncadd [#allocation10], %s122
          %s125 = sshll.u32 %s2, 4
          %s126 = int_to_ptr.vmem [resolvable:$true] %s125
          %128 = dma.vmem_to_smem %s126, 16, [#allocation8], [#allocation10]
        $region20: #{oscillation_loss.1} parent=11 // pred_fallthru
          _
      $region12: #{oscillation_loss.1} parent=5 // pred_fallthru
        _
      %p129 = scmp.lt.s32.totalorder %s11, 2
      // Predicated region
      $region21: #{oscillation_loss.1} parent=5 // pred_check
        %p130 = pneg %p129
      $region22: #{oscillation_loss.1} parent=5 // pred_check_branch
        %132 = sbr.rel (%p130) target = $region24
      $region23: #{oscillation_loss.1} parent=5 // pred_region
        // Predicated region
        $region25: #{oscillation_loss.1} parent=23 // pred_check
          %p133 = pneg %p52
        $region26: #{oscillation_loss.1} parent=23 // pred_check_branch
          %135 = sbr.rel (%p133) target = $region28
        $region27: #{oscillation_loss.1} parent=23 // pred_region
          %s136 = sand.u32 %s42, 1
          %s137 = sand.u32 %s42, 1
          %s138 = smul.addr %s137, 64
          %s139 = scalar_lea.vmem [#allocation7], %s138
          %s140 = smul.addr %s11, 8
          %s141 = scalar_lea.vmem %s1, %s140
          // Predicated region
          $region29: #{oscillation_loss.1} parent=27 // pred_check
            _
          $region30: #{oscillation_loss.1} parent=27 // pred_check_branch
            %143 = sbr.rel (0) target = $region32
          $region31: #{oscillation_loss.1} parent=27 // pred_region
            // Predicated region
            $region33: #{oscillation_loss.1} parent=31 // pred_check
              _
            $region34: #{oscillation_loss.1} parent=31 // pred_check_branch
              %145 = sbr.rel (0) target = $region36
            $region35: #{oscillation_loss.1} parent=31 // pred_region
              // Predicated region
              $region48: #{oscillation_loss.1} parent=35 // pred_check
                _
              $region49: #{oscillation_loss.1} parent=35 // pred_check_branch
                %174 = sbr.rel (0) target = $region51
              $region50: #{oscillation_loss.1} parent=35 // pred_region
                loop: start=0, step=1, limit=1
                $region52: #{oscillation_loss.1} parent=50 // loop_pre_header
                  _
                $region53: #{oscillation_loss.1} parent=50 // loop_header
                  %s176 = sphi 0, %s180
                  %p177 = scmp.ge.s32.totalorder %s176, 1
                  %s181 = sphi %s141, %s141
                  %s182 = sphi %s139, %s139
                $region54: #{oscillation_loss.1} parent=50 // loop_header_branch
                  %179 = sbr.rel (%p177) target = $region58
                $region55: #{oscillation_loss.1} parent=50 // loop_body
                  %v183 = vld [vmem:[%s181] sm:$0xff]
                  %184 = vst [vmem:[%s182] sm:$0xff] %v183
                  %v185 = vld [vmem:[%s181 + $0x10] sm:$0xff]
                  %186 = vst [vmem:[%s182 + $0x8] sm:$0xff] %v185
                  %v187 = vld [vmem:[%s181 + $0x20] sm:$0xff]
                  %188 = vst [vmem:[%s182 + $0x10] sm:$0xff] %v187
                  %v189 = vld [vmem:[%s181 + $0x30] sm:$0xff]
                  %190 = vst [vmem:[%s182 + $0x18] sm:$0xff] %v189
                  %v191 = vld [vmem:[%s181 + $0x40] sm:$0xff]
                  %192 = vst [vmem:[%s182 + $0x20] sm:$0xff] %v191
                  %v193 = vld [vmem:[%s181 + $0x50] sm:$0xff]
                  %194 = vst [vmem:[%s182 + $0x28] sm:$0xff] %v193
                  %v195 = vld [vmem:[%s181 + $0x60] sm:$0xff]
                  %196 = vst [vmem:[%s182 + $0x30] sm:$0xff] %v195
                  %v197 = vld [vmem:[%s181 + $0x70] sm:$0xff]
                  %198 = vst [vmem:[%s182 + $0x38] sm:$0xff] %v197
                $region56: #{oscillation_loss.1} parent=50 // loop_footer
                  %s180 = sadd.s32 1, %s176
                $region57: #{oscillation_loss.1} parent=50 // loop_footer_branch
                  %175 = sbr.rel target = $region53
                $region58: #{oscillation_loss.1} parent=50 // loop_exit
                  _
              $region51: #{oscillation_loss.1} parent=35 // pred_fallthru
                _
              // Predicated region
              $region59: #{oscillation_loss.1} parent=35 // pred_check
                _
              $region60: #{oscillation_loss.1} parent=35 // pred_check_branch
                %200 = sbr.rel target = $region62
              $region61: #{oscillation_loss.1} parent=35 // pred_region
                _
              $region62: #{oscillation_loss.1} parent=35 // pred_fallthru
                _
            $region36: #{oscillation_loss.1} parent=31 // pred_fallthru
              _
            // Predicated region
            $region37: #{oscillation_loss.1} parent=31 // pred_check
              _
            $region38: #{oscillation_loss.1} parent=31 // pred_check_branch
              %147 = sbr.rel target = $region40
            $region39: #{oscillation_loss.1} parent=31 // pred_region
              loop: start=0, step=1, limit=1
              $region41: #{oscillation_loss.1} parent=39 // loop_pre_header
                _
              $region42: #{oscillation_loss.1} parent=39 // loop_header
                %s150 = sphi 0, %s154
                %p151 = scmp.ge.s32.totalorder %s150, 1
                %s155 = sphi %s141, %s141
                %s156 = sphi %s139, %s139
              $region43: #{oscillation_loss.1} parent=39 // loop_header_branch
                %153 = sbr.rel (%p151) target = $region47
              $region44: #{oscillation_loss.1} parent=39 // loop_body
                %v157 = vld [vmem:[%s155] sm:$0xff]
                %158 = vst [vmem:[%s156] sm:$0xff] %v157
                %v159 = vld [vmem:[%s155 + $0x10] sm:$0xff]
                %160 = vst [vmem:[%s156 + $0x8] sm:$0xff] %v159
                %v161 = vld [vmem:[%s155 + $0x20] sm:$0xff]
                %162 = vst [vmem:[%s156 + $0x10] sm:$0xff] %v161
                %v163 = vld [vmem:[%s155 + $0x30] sm:$0xff]
                %164 = vst [vmem:[%s156 + $0x18] sm:$0xff] %v163
                %v165 = vld [vmem:[%s155 + $0x40] sm:$0xff]
                %166 = vst [vmem:[%s156 + $0x20] sm:$0xff] %v165
                %v167 = vld [vmem:[%s155 + $0x50] sm:$0xff]
                %168 = vst [vmem:[%s156 + $0x28] sm:$0xff] %v167
                %v169 = vld [vmem:[%s155 + $0x60] sm:$0xff]
                %170 = vst [vmem:[%s156 + $0x30] sm:$0xff] %v169
                %v171 = vld [vmem:[%s155 + $0x70] sm:$0xff]
                %172 = vst [vmem:[%s156 + $0x38] sm:$0xff] %v171
              $region45: #{oscillation_loss.1} parent=39 // loop_footer
                %s154 = sadd.s32 1, %s150
              $region46: #{oscillation_loss.1} parent=39 // loop_footer_branch
                %149 = sbr.rel target = $region42
              $region47: #{oscillation_loss.1} parent=39 // loop_exit
                _
            $region40: #{oscillation_loss.1} parent=31 // pred_fallthru
              _
          $region32: #{oscillation_loss.1} parent=27 // pred_fallthru
            _
          %201 = vnop
        $region28: #{oscillation_loss.1} parent=23 // pred_fallthru
          _
      $region24: #{oscillation_loss.1} parent=5 // pred_fallthru
        _
      %p202 = scmp.le.s32.totalorder 1, %s11
      %p203 = scmp.lt.s32.totalorder %s11, 3
      %p204 = pnand %p202, %p203
      %p205 = pneg %p204
      // Predicated region
      $region63: #{oscillation_loss.1} parent=5 // pred_check
        _
      $region64: #{oscillation_loss.1} parent=5 // pred_check_branch
        %207 = sbr.rel (%p204) target = $region66
      $region65: #{oscillation_loss.1} parent=5 // pred_region
        %s208 = ssub.s32 %s11, 1
        %s209 = sand.u32 %s45, 1
        %s210 = sand.u32 %s45, 1
        %s211 = smul.addr %s210, 64
        %s212 = scalar_lea.vmem [#allocation7], %s211
        // Predicated region
        $region67: #{oscillation_loss.1} parent=65 // pred_check
          %p213 = pneg %p58
        $region68: #{oscillation_loss.1} parent=65 // pred_check_branch
          %215 = sbr.rel (%p213) target = $region70
        $region69: #{oscillation_loss.1} parent=65 // pred_region
          _
        $region70: #{oscillation_loss.1} parent=65 // pred_fallthru
          _
        // Predicated region
        $region71: #{oscillation_loss.1} parent=65 // pred_check
          %p216 = pneg %p79
        $region72: #{oscillation_loss.1} parent=65 // pred_check_branch
          %218 = sbr.rel (%p216) target = $region74
        $region73: #{oscillation_loss.1} parent=65 // pred_region
          %219 = dma.done [#allocation10], 16
        $region74: #{oscillation_loss.1} parent=65 // pred_fallthru
          _
        %220 = sfence
        %p221 = pneg %p32
        %p222 = pneg %p29
        %s223 = sand.u32 %s45, 1
        %s224 = sand.u32 %s45, 1
        %s225 = smul.addr %s224, 64
        %s226 = scalar_lea.vmem [#allocation7], %s225
        %p227 = pneg %p58
        %p228 = pneg %p55
        %p229 = pneg %p79
        %p230 = pneg %p76
        %p231 = pneg %p100
        %p232 = pneg %p97
        %p233 = scmp.eq.s32.totalorder %s16, 0
        // Predicated region
        $region75: #{oscillation_loss.1} parent=65 // pred_check
          %p234 = pneg %p233
        $region76: #{oscillation_loss.1} parent=65 // pred_check_branch
          %236 = sbr.rel (%p234) target = $region78
        $region77: #{oscillation_loss.1} parent=65 // pred_region
          %vm237 = vcmask 7168
          %238 = vst.msk [vmem:[#allocation2] sm:$0xff] %vm237, 0.0
          %239 = vst.msk [vmem:[#allocation3] sm:$0xff] %vm237, 0.0
          %240 = vst.msk [vmem:[#allocation4] sm:$0xff] %vm237, 0.0
          %241 = vst.msk [vmem:[#allocation5] sm:$0xff] %vm237, 0.0
          %v242 = vld [vmem:[%s0] sm:$0x3]
          %v244 = vrot.slane %v242, 1
          %v246 = vsub.f32 %v242, %v244
          %v247 = vmul.f32 %v246, %v246
          %vm248 = vcmask 253952
          %v249 = vsel %vm248, %v247, 0.0
          %250 = vadd.xlane.f32.xlu0 %v249
          %v251 = vpop.xlane.xlu0 %250
          %vm252 = vcmask 0
          %253 = vst.msk [vmem:[#allocation6] sm:$0x1] %vm252, %v251
        $region78: #{oscillation_loss.1} parent=65 // pred_fallthru
          _
        %v254 = vld [vmem:[%s212] sm:$0xff]
        %v255 = vld [vmem:[%s212 + $0x8] sm:$0xff]
        %v256 = vld [vmem:[%s212 + $0x10] sm:$0xff]
        %v257 = vld [vmem:[%s212 + $0x18] sm:$0xff]
        %v258 = vld [vmem:[%s212 + $0x20] sm:$0xff]
        %v259 = vld [vmem:[%s212 + $0x28] sm:$0xff]
        %v260 = vld [vmem:[%s212 + $0x30] sm:$0xff]
        %v261 = vld [vmem:[%s212 + $0x38] sm:$0xff]
        %vm262 = vcmp.eq.f32.partialorder %v254, 0.0
        %v263 = vsel %vm262, 1, 0
        %v264 = vcvt.s32.f32 %v263
        %v265 = vsub.f32 %v257, %v259
        %v266 = vsub.f32 %v258, %v260
        %v267 = vmul.f32 %v255, %v256
        %v268 = vmul.f32 %v267, 2.0
        %v269 = vmul.f32 %v268, %v260
        %v270 = vadd.f32 %v261, %v269
        %v271 = vmul.f32 %v256, %v256
        %v272 = vmul.f32 %v271, %v259
        %v273 = vadd.f32 %v270, %v272
        %v274 = vld [vmem:[#allocation2] sm:$0xff]
        %v275 = vmul.f32 %v265, %v265
        %v276 = vmul.f32 %v264, %v275
        %277 = vadd.xlane.f32.xlu0 %v276
        %v278 = vpop.xlane.xlu0 %277
        %v279 = vadd.f32 %v274, %v278
        %vm280 = vcmask 7168
        %281 = vst.msk [vmem:[#allocation2] sm:$0xff] %vm280, %v279
        %v282 = vld [vmem:[#allocation3] sm:$0xff]
        %v283 = vmul.f32 %v266, %v266
        %v284 = vmul.f32 %v264, %v283
        %285 = vadd.xlane.f32.xlu0 %v284
        %v286 = vpop.xlane.xlu0 %285
        %v287 = vadd.f32 %v282, %v286
        %288 = vst.msk [vmem:[#allocation3] sm:$0xff] %vm280, %v287
        %v289 = vld [vmem:[#allocation4] sm:$0xff]
        %v290 = vmul.f32 %v273, %v273
        %291 = vadd.xlane.f32.xlu0 %v290
        %v292 = vpop.xlane.xlu0 %291
        %v293 = vadd.f32 %v289, %v292
        %294 = vst.msk [vmem:[#allocation4] sm:$0xff] %vm280, %v293
        %v295 = vld [vmem:[#allocation5] sm:$0xff]
        %296 = vadd.xlane.f32.xlu0 %v264
        %v297 = vpop.xlane.xlu0 %296
        %v298 = vadd.f32 %v295, %v297
        %299 = vst.msk [vmem:[#allocation5] sm:$0xff] %vm280, %v298
        %p300 = scmp.eq.s32.totalorder %s16, 1
        // Predicated region
        $region79: #{oscillation_loss.1} parent=65 // pred_check
          %p301 = pneg %p300
        $region80: #{oscillation_loss.1} parent=65 // pred_check_branch
          %303 = sbr.rel (%p301) target = $region82
        $region81: #{oscillation_loss.1} parent=65 // pred_region
          %v304 = vld [vmem:[#allocation2] sm:$0xff]
          %v305 = vsel %vm280, %v304, 0.0
          %v306 = vrot.slane %v305, 4
          %v307 = vadd.f32 %v305, %v306
          %v308 = vrot.slane %v307, 2
          %v309 = vadd.f32 %v307, %v308
          %v310 = vrot.slane %v309, 1
          %v311 = vadd.f32 %v309, %v310
          %v312 = vld [vmem:[#allocation3] sm:$0xff]
          %v313 = vsel %vm280, %v312, 0.0
          %v314 = vrot.slane %v313, 4
          %v315 = vadd.f32 %v313, %v314
          %v316 = vrot.slane %v315, 2
          %v317 = vadd.f32 %v315, %v316
          %v318 = vrot.slane %v317, 1
          %v319 = vadd.f32 %v317, %v318
          %v320 = vld [vmem:[#allocation4] sm:$0xff]
          %v321 = vsel %vm280, %v320, 0.0
          %v322 = vrot.slane %v321, 4
          %v323 = vadd.f32 %v321, %v322
          %v324 = vrot.slane %v323, 2
          %v325 = vadd.f32 %v323, %v324
          %v326 = vrot.slane %v325, 1
          %v327 = vadd.f32 %v325, %v326
          %v328 = vld [vmem:[#allocation5] sm:$0xff]
          %v329 = vsel %vm280, %v328, 0.0
          %v330 = vrot.slane %v329, 4
          %v331 = vadd.f32 %v329, %v330
          %v332 = vrot.slane %v331, 2
          %v333 = vadd.f32 %v331, %v332
          %v334 = vrot.slane %v333, 1
          %v335 = vadd.f32 %v333, %v334
          %s336 = sld [smem:[#allocation8]]
          %s337 = smul.f32 %s336, 0.03125
          %v338 = vld [vmem:[#allocation6] sm:$0x1]
          %v339 = vstv %s337
          %v340 = vmul.f32 %v339, %v338
          %s341 = sld [smem:[#allocation8 + $0x1]]
          %v342 = vstv %s341
          %v343 = vmul.f32 %v342, %v311
          %s344 = sld [smem:[#allocation8 + $0x2]]
          %v345 = vstv %s344
          %v346 = vmul.f32 %v345, %v319
          %v347 = vadd.f32 %v343, %v346
          %v348 = vrcp.pop %v335
          %v349 = vmul.f32 %v347, %v348
          %s350 = sld [smem:[#allocation8 + $0x3]]
          %s351 = smul.f32 %s350, 0.0005
          %v352 = vstv %s351
          %v353 = vmul.f32 %v352, %v327
          %v354 = vadd.f32 %v340, %v349
          %v355 = vadd.f32 %v354, %v353
          %vm356 = vcmask 0
          %357 = vst.msk [vmem:[#allocation11] sm:$0x1] %vm356, %v355
        $region82: #{oscillation_loss.1} parent=65 // pred_fallthru
          _
        // Predicated region
        $region83: #{oscillation_loss.1} parent=65 // pred_check
          %p358 = pneg %p97
        $region84: #{oscillation_loss.1} parent=65 // pred_check_branch
          %360 = sbr.rel (%p358) target = $region86
        $region85: #{oscillation_loss.1} parent=65 // pred_region
          %s362 = ssub.s32 16, 16
          %363 = vsyncadd [#allocation9], %s362
          %s365 = sshll.u32 [#allocation11], 4
          %s366 = int_to_ptr.vmem [resolvable:$true] %s365
          %368 = dma.vmem_to_hbm [thread:$0]  %s366, 16, %s3, [#allocation9]
        $region86: #{oscillation_loss.1} parent=65 // pred_fallthru
          _
        // Predicated region
        $region87: #{oscillation_loss.1} parent=65 // pred_check
          %p369 = pneg %p97
        $region88: #{oscillation_loss.1} parent=65 // pred_check_branch
          %371 = sbr.rel (%p369) target = $region90
        $region89: #{oscillation_loss.1} parent=65 // pred_region
          %372 = dma.done [#allocation9], 16
        $region90: #{oscillation_loss.1} parent=65 // pred_fallthru
          _
      $region66: #{oscillation_loss.1} parent=5 // pred_fallthru
        _
      %p373 = scmp.le.s32.totalorder 2, %s11
      // Predicated region
      $region91: #{oscillation_loss.1} parent=5 // pred_check
        %p374 = pneg %p373
      $region92: #{oscillation_loss.1} parent=5 // pred_check_branch
        %376 = sbr.rel (%p374) target = $region94
      $region93: #{oscillation_loss.1} parent=5 // pred_region
        %s377 = ssub.s32 %s11, 2
      $region94: #{oscillation_loss.1} parent=5 // pred_fallthru
        _
    $region6: #{oscillation_loss.1} parent=1 // loop_footer
      %s15 = sadd.s32 1, %s11
    $region7: #{oscillation_loss.1} parent=1 // loop_footer_branch
      %10 = sbr.rel target = $region3
    $region8: #{oscillation_loss.1} parent=1 // loop_exit
      _
    %378 = vsyncpa [#allocation9], 1
    %s379 = scalar_lea.sflag [#allocation9], 1
    %380 = vsyncpa %s379, 1
    %381 = vsyncpa [#allocation10], 1
    %s382 = scalar_lea.sflag [#allocation10], 1
    %383 = vsyncpa %s382, 1

</llo_original>
